<compile_context>
chip_gen: v6e
topology: v6e:2x2x1
jax: 0.10.0
libtpu: 0.0.40
codegen_flags: <defaults>
</compile_context>

<pallas_src>
import jax
import jax.numpy as jnp
import numpy as np
from jax import lax
from jax.experimental import pallas as pl
from jax.experimental.pallas import tpu as pltpu

# ---------------- constants (from DSLPIDController.__init__) ----------------
PWM2RPM_SCALE = 0.2685
PWM2RPM_CONST = 4070.3
MIN_PWM = 20000.0          # unused by forward(); kept for parity
MAX_PWM = 65535.0
KF = 3.16e-10
MAX_RPM = 21714.0

# packed-input channel layout (leading dim of the (29, Bp/128, 128) operand)
_POS, _QUAT, _VEL, _RPY = 0, 3, 7, 10
_TPOS, _TVEL, _TYAW = 13, 16, 19
_IPE, _IRE, _LRPY = 20, 23, 26
NUM_IN_ROWS = 29
NUM_OUT_ROWS = 7            # 4 cmd + 3 new integral_pos_error

SUB = 8                     # sublanes per channel strip
LANE = 128                  # lanes per strip (one vreg per strip per channel)
GROUP = SUB * LANE          # drones per strip = 1024
MAX_GROUPS_PER_BLOCK = 16   # block = (29, 128, 128) f32 ~ 1.9 MiB in / 0.45 MiB out


def _cdiv(a, b):
    return -(-a // b)


def make_params(g, mass):
    """Deterministic parameter initialization matching the module's __init__."""
    return dict(
        P_COEFF_FOR=jnp.array([0.4, 0.4, 1.25], jnp.float32),
        I_COEFF_FOR=jnp.array([0.05, 0.05, 0.05], jnp.float32),
        D_COEFF_FOR=jnp.array([0.2, 0.2, 0.5], jnp.float32),
        P_COEFF_TOR=jnp.array([70000.0, 70000.0, 60000.0], jnp.float32),
        I_COEFF_TOR=jnp.array([0.0, 0.0, 500.0], jnp.float32),
        D_COEFF_TOR=jnp.array([20000.0, 20000.0, 12000.0], jnp.float32),
        GRAVITY=jnp.array([0.0, 0.0, abs(g) * mass], jnp.float32),
        MIXER_MATRIX=jnp.array([[-0.5, -0.5, 1.0],
                                [-0.5, 0.5, -1.0],
                                [0.5, 0.5, 1.0],
                                [0.5, -0.5, -1.0]], jnp.float32),
    )


def _static_params(params):
    """Parameter dict -> nested Python floats (baked into the kernel)."""
    out = {}
    for k, v in params.items():
        a = np.asarray(jax.device_get(v), dtype=np.float64)
        if a.ndim == 1:
            out[k] = tuple(float(x) for x in a)
        else:
            out[k] = tuple(tuple(float(x) for x in row) for row in a)
    return out


# ------------------- quaternion glue (plain JAX, jitted wrapper) -------------
def quaternion_to_euler(q):                       # quaternion (w, x, y, z)
    w, x, y, z = q[0], q[1], q[2], q[3]
    roll = jnp.arctan2(2.0 * (w * x + y * z), 1.0 - 2.0 * (x * x + y * y))
    pitch = jnp.arcsin(jnp.clip(2.0 * (w * y - x * z), -1.0, 1.0))
    yaw = jnp.arctan2(2.0 * (w * z + x * y), 1.0 - 2.0 * (y * y + z * z))
    return jnp.stack([roll, pitch, yaw]).astype(jnp.float32)


def quaternion_to_rotation_matrix(q):
    w, x, y, z = q[0], q[1], q[2], q[3]
    return jnp.array(
        [[1 - 2 * (y * y + z * z), 2 * (x * y - w * z), 2 * (x * z + w * y)],
         [2 * (x * y + w * z), 1 - 2 * (x * x + z * z), 2 * (y * z - w * x)],
         [2 * (x * z - w * y), 2 * (y * z + w * x), 1 - 2 * (x * x + y * y)]],
        jnp.float32)


# --------------------------------- kernel ------------------------------------
def _make_pid_kernel(dt, sp):
    PF, IF, DF = sp['P_COEFF_FOR'], sp['I_COEFF_FOR'], sp['D_COEFF_FOR']
    PT, IT, DT_ = sp['P_COEFF_TOR'], sp['I_COEFF_TOR'], sp['D_COEFF_TOR']
    GRAV, MIX = sp['GRAVITY'], sp['MIXER_MATRIX']
    INV_4KF = 1.0 / (4.0 * KF)
    INV_SCALE = 1.0 / PWM2RPM_SCALE
    INV_MAX_RPM = 1.0 / MAX_RPM
    inv_dt = 1.0 / dt

    def kernel(x_ref, o_ref):
        # block shape: x_ref (29, 8*G, 128), o_ref (7, 8*G, 128)
        n_groups = x_ref.shape[1] // SUB

        @pl.loop(0, n_groups)
        def _(g):
            r0 = pl.multiple_of(g * SUB, SUB)

            def row(c):                               # (8, 128) = one vreg
                return x_ref[c, pl.ds(r0, SUB), :]

            def put(c, v):                            # full-tile unmasked store
                o_ref[c, pl.ds(r0, SUB), :] = v

            # ---- position / velocity PID -> thrust vector; emit ipe early ---
            tt = []
            for i in range(3):
                pe_i = row(_TPOS + i) - row(_POS + i)
                ve_i = row(_TVEL + i) - row(_VEL + i)
                ipe_i = jnp.clip(row(_IPE + i) + pe_i * dt, -2.0, 2.0)
                put(4 + i, ipe_i)                     # rows 4..6 of the output
                tt.append(PF[i] * pe_i + IF[i] * ipe_i + DF[i] * ve_i + GRAV[i])

            # ---- desired rotation columns tx, ty, tz (pure VPU + EUP) -------
            tyaw = row(_TYAW)
            cyaw, syaw = jnp.cos(tyaw), jnp.sin(tyaw)
            inv_tt = lax.rsqrt(tt[0] * tt[0] + tt[1] * tt[1] + tt[2] * tt[2])
            tz = [tt[i] * inv_tt for i in range(3)]
            cxv = -tz[2] * syaw                       # cross(tz, [c, s, 0])
            cyv = tz[2] * cyaw
            czv = tz[0] * syaw - tz[1] * cyaw
            inv_c = lax.rsqrt(cxv * cxv + cyv * cyv + czv * czv)
            ty = [cxv * inv_c, cyv * inv_c, czv * inv_c]
            tx = [ty[1] * tz[2] - ty[2] * tz[1],
                  ty[2] * tz[0] - ty[0] * tz[2],
                  ty[0] * tz[1] - ty[1] * tz[0]]

            # ---- rotation matrix R(quat), built lazily just before use ------
            qw, qx, qy, qz = (row(_QUAT + i) for i in range(4))
            col0 = (1.0 - 2.0 * (qy * qy + qz * qz),
                    2.0 * (qx * qy + qw * qz),
                    2.0 * (qx * qz - qw * qy))
            col1 = (2.0 * (qx * qy - qw * qz),
                    1.0 - 2.0 * (qx * qx + qz * qz),
                    2.0 * (qy * qz + qw * qx))
            col2 = (2.0 * (qx * qz + qw * qy),
                    2.0 * (qy * qz - qw * qx),
                    1.0 - 2.0 * (qx * qx + qy * qy))

            def dot3(a, b):
                return a[0] * b[0] + a[1] * b[1] + a[2] * b[2]

            # thrust along current body z axis (can be negative -> NaN, exactly
            # as in the reference module; semantics preserved, no clamping)
            scalar_thrust = dot3(tt, col2)
            thrust = (jnp.sqrt(scalar_thrust * INV_4KF) - PWM2RPM_CONST) * INV_SCALE

            # rot_error = vee(Rd^T R - R^T Rd)
            re = [dot3(tz, col1) - dot3(col2, ty),
                  dot3(tx, col2) - dot3(col0, tz),
                  dot3(ty, col0) - dot3(col1, tx)]

            # ---- attitude PID -> torque --------------------------------------
            tq = []
            for i in range(3):
                rre_i = -(row(_RPY + i) - row(_LRPY + i)) * inv_dt
                ire_i = row(_IRE + i) - re[i] * dt
                tq.append(-PT[i] * re[i] + DT_[i] * rre_i + IT[i] * ire_i)

            # ---- constant mixer (+-0.5 / +-1), pwm clip, cmd -----------------
            for k in range(4):
                mix = MIX[k][0] * tq[0] + MIX[k][1] * tq[1] + MIX[k][2] * tq[2]
                pwm = jnp.clip(thrust + mix, 0.0, MAX_PWM)
                rpm = PWM2RPM_SCALE * pwm + PWM2RPM_CONST
                put(k, jnp.square(rpm * INV_MAX_RPM) * 2.0 - 1.0)

    return kernel


# --------------------------------- wrapper -----------------------------------
def build_dsl_pid_forward(params, dt, max_groups_per_block=MAX_GROUPS_PER_BLOCK):
    """Bake dt + gains into a jitted batched forward(state, target, ctrl_state)."""
    sp = _static_params(params)
    kernel = _make_pid_kernel(float(dt), sp)

    @jax.jit
    def _forward(state, control_target, ipe, ire, lrpy):
        B = state.shape[0]
        pos, quat, vel = state[:, 0:3], state[:, 3:7], state[:, 7:10]   # angvel unused
        tpos, tvel, tyaw = (control_target[:, 0:3], control_target[:, 3:6],
                            control_target[:, 6:7])
        rpy = jax.vmap(quaternion_to_euler)(quat)

        # one packed operand: 29 channels x drones (fused into the jit program)
        packed = jnp.concatenate(
            [pos, quat, vel, rpy, tpos, tvel, tyaw, ipe, ire, lrpy],
            axis=1).astype(jnp.float32).T                                # (29, B)

        # block planning (static: B is a trace-time shape)
        groups = min(max_groups_per_block, _cdiv(B, GROUP))
        per_block = groups * GROUP
        n_blocks = _cdiv(B, per_block)
        Bp = n_blocks * per_block
        if Bp != B:
            packed = jnp.pad(packed, ((0, 0), (0, Bp - B)))   # zero pad -> finite
        packed = packed.reshape(NUM_IN_ROWS, Bp // LANE, LANE)

        out = pl.pallas_call(
            kernel,
            out_shape=jax.ShapeDtypeStruct((NUM_OUT_ROWS, Bp // LANE, LANE),
                                           jnp.float32),
            grid=(n_blocks,),
            in_specs=[pl.BlockSpec((NUM_IN_ROWS, SUB * groups, LANE),
                                   lambda i: (0, i, 0))],
            out_specs=pl.BlockSpec((NUM_OUT_ROWS, SUB * groups, LANE),
                                   lambda i: (0, i, 0)),
            compiler_params=pltpu.CompilerParams(
                dimension_semantics=("parallel",)),
        )(packed)

        out = out.reshape(NUM_OUT_ROWS, Bp)[:, :B]
        cmd = out[0:4].T                    # (B, 4)   (transpose fused by XLA)
        new_ipe = out[4:7].T                # (B, 3)
        return cmd, new_ipe, rpy

    def forward(state, control_target, controller_state):
        state = jnp.asarray(state, jnp.float32)
        control_target = jnp.asarray(control_target, jnp.float32)
        squeeze = state.ndim == 1
        if squeeze:
            state = state[None]
            control_target = control_target[None]
            controller_state = {k: jnp.asarray(v, jnp.float32)[None]
                                for k, v in controller_state.items()}
        B = state.shape[0]
        z3 = jnp.zeros((B, 3), jnp.float32)
        ipe = jnp.asarray(controller_state.get('integral_pos_error', z3), jnp.float32)
        ire = jnp.asarray(controller_state.get('integral_rpy_error', z3), jnp.float32)
        if 'last_rpy' in controller_state:
            lrpy = jnp.asarray(controller_state['last_rpy'], jnp.float32)
        else:
            lrpy = jax.vmap(quaternion_to_euler)(state[:, 3:7])

        cmd, new_ipe, rpy = _forward(state, control_target, ipe, ire, lrpy)

        new_state = {
            'integral_pos_error': new_ipe,
            # NOTE: the reference module stores integral_pos_error under the
            # 'integral_rpy_error' key; reproduced verbatim.
            'integral_rpy_error': new_ipe,
            'last_rpy': rpy,
        }
        if squeeze:
            cmd = cmd[0]
            new_state = {k: v[0] for k, v in new_state.items()}
        return cmd, new_state

    return forward


# --------------------------- plain-JAX reference ------------------------------
def _reference_single(state, control_target, ipe0, ire0, lrpy0, params, dt):
    pos, quat, vel = state[0:3], state[3:7], state[7:10]
    target_pos, target_vel, target_yaw = (control_target[0:3], control_target[3:6],
                                          control_target[6:7])
    rpy = quaternion_to_euler(quat)
    rot = quaternion_to_rotation_matrix(quat)
    pos_error = target_pos - pos
    vel_error = target_vel - vel
    ipe = jnp.clip(ipe0 + pos_error * dt, -2.0, 2.0)
    tt = (params['P_COEFF_FOR'] * pos_error + params['I_COEFF_FOR'] * ipe
          + params['D_COEFF_FOR'] * vel_error + params['GRAVITY'])
    hp = jax.lax.Precision.HIGHEST
    scalar_thrust = jnp.dot(tt, rot[:, 2], precision=hp)
    target_x_c = jnp.concatenate([jnp.cos(target_yaw), jnp.sin(target_yaw),
                                  jnp.zeros_like(target_yaw)])
    tz = tt / jnp.linalg.norm(tt)
    yax = jnp.cross(tz, target_x_c)
    ty = yax / jnp.linalg.norm(yax)
    tx = jnp.cross(ty, tz)
    Rd = jnp.stack([tx, ty, tz], axis=-1)
    E = (jnp.matmul(Rd.T, rot, precision=hp) - jnp.matmul(rot.T, Rd, precision=hp))
    rot_error = jnp.stack([E[2, 1], E[0, 2], E[1, 0]])
    rre = -(rpy - lrpy0) / dt
    ire = ire0 - rot_error * dt
    tq = (-params['P_COEFF_TOR'] * rot_error + params['D_COEFF_TOR'] * rre
          + params['I_COEFF_TOR'] * ire)
    thrust = (jnp.sqrt(scalar_thrust / (4.0 * KF)) - PWM2RPM_CONST) / PWM2RPM_SCALE
    pwm = jnp.clip(thrust + jnp.matmul(params['MIXER_MATRIX'], tq, precision=hp),
                   0.0, 65535.0)
    rpms = PWM2RPM_SCALE * pwm + PWM2RPM_CONST
    cmd = jnp.square(rpms / MAX_RPM) * 2.0 - 1.0
    return cmd, ipe, rpy


def reference_forward_batched(state, control_target, controller_state, params, dt):
    fn = lambda s, t, a, b, c: _reference_single(s, t, a, b, c, params, dt)
    return jax.vmap(fn)(state, control_target,
                        controller_state['integral_pos_error'],
                        controller_state['integral_rpy_error'],
                        controller_state['last_rpy'])


# ----------------------------------- main -------------------------------------
def _make_demo_inputs(key, B):
    """Batch of drones near hover (keeps scalar_thrust > 0 -> no sqrt NaN,
    which is outside the controller's domain)."""
    ks = jax.random.split(key, 10)
    pos = 0.03 * jax.random.normal(ks[0], (B, 3), jnp.float32)
    quat = (jnp.concatenate([jnp.ones((B, 1), jnp.float32),
                             jnp.zeros((B, 3), jnp.float32)], axis=1)
            + 0.01 * jax.random.normal(ks[1], (B, 4), jnp.float32))
    quat = quat / jnp.linalg.norm(quat, axis=1, keepdims=True)
    vel = 0.03 * jax.random.normal(ks[2], (B, 3), jnp.float32)
    angvel = 0.03 * jax.random.normal(ks[3], (B, 3), jnp.float32)
    state = jnp.concatenate([pos, quat, vel, angvel], axis=1)          # (B, 13)

    tpos = pos + 0.03 * jax.random.normal(ks[4], (B, 3), jnp.float32)
    tvel = 0.02 * jax.random.normal(ks[5], (B, 3), jnp.float32)
    tyaw = 0.1 * jax.random.normal(ks[6], (B, 1), jnp.float32)
    control_target = jnp.concatenate([tpos, tvel, tyaw], axis=1)       # (B, 7)

    rpy0 = jax.vmap(quaternion_to_euler)(quat)
    controller_state = {
        'integral_pos_error': 0.005 * jax.random.normal(ks[7], (B, 3), jnp.float32),
        'integral_rpy_error': 0.005 * jax.random.normal(ks[8], (B, 3), jnp.float32),
        'last_rpy': rpy0 + 0.0005 * jax.random.normal(ks[9], (B, 3), jnp.float32),
    }
    return state, control_target, controller_state


if __name__ == "__main__":
    dt = 0.01
    g = 9.81
    mass = 0.027                     # crazyflie-like uav_params['mass']
    params = make_params(g, mass)
    forward = build_dsl_pid_forward(params, dt)

    key = jax.random.PRNGKey(0)
    k1, k2 = jax.random.split(key)

    # Case 1: small batch (single strip / single block path).
    # Case 2: batch spanning multiple (8,128) strips (exercises the in-kernel loop).
    for B, kk in ((200, k1), (2500, k2)):
        state, control_target, controller_state = _make_demo_inputs(kk, B)

        cmd, new_state = forward(state, control_target, controller_state)
        jax.block_until_ready(cmd)

        ref_cmd, ref_ipe, ref_rpy = reference_forward_batched(
            state, control_target, controller_state, params, dt)

        assert bool(jnp.all(jnp.isfinite(cmd))), "kernel produced non-finite cmd"
        assert bool(jnp.all(jnp.isfinite(ref_cmd))), "reference produced non-finite cmd"
        assert jnp.allclose(cmd, ref_cmd, atol=2e-3, rtol=2e-3), (B, cmd[:4], ref_cmd[:4])
        assert jnp.allclose(new_state['integral_pos_error'], ref_ipe, atol=1e-4, rtol=1e-4)
        assert jnp.allclose(new_state['integral_rpy_error'], ref_ipe, atol=1e-4, rtol=1e-4)
        assert jnp.allclose(new_state['last_rpy'], ref_rpy, atol=1e-5, rtol=1e-5)

    print("KERNEL_OK")
</pallas_src>

<mosaic_0001>
module attributes {stable_mosaic.version = 11 : i64} {
  func.func @kernel(%arg0: i32, %arg1: memref<29x8x128xf32, #tpu.memory_space<vmem>>, %arg2: memref<7x8x128xf32, #tpu.memory_space<vmem>>) attributes {dimension_semantics = [#tpu.dimension_semantics<parallel>], iteration_bounds = array<i64: 1>, scalar_prefetch = 0 : i64, scratch_operands = 0 : i64, tpu.core_type = #tpu.core_type<tc>, window_params = [{transform_indices = @transform_0, window_bounds = array<i64: 29, 8, 128>}, {transform_indices = @transform_1, window_bounds = array<i64: 7, 8, 128>}]} {
    %c0_i32 = arith.constant 0 : i32
    %c1_i32 = arith.constant 1 : i32
    %0 = arith.muli %c0_i32, %c1_i32 : i32
    %c0_i32_0 = arith.constant 0 : i32
    %1 = arith.addi %c0_i32_0, %0 : i32
    %c8_i32 = arith.constant 8 : i32
    %2 = arith.muli %1, %c8_i32 : i32
    %3 = tpu.assume_multiple %2, 8 : i32
    %c13 = arith.constant 13 : index
    %4 = arith.index_cast %3 : i32 to index
    %c0 = arith.constant 0 : index
    %5 = vector.load %arg1[%c13, %4, %c0] : memref<29x8x128xf32, #tpu.memory_space<vmem>>, vector<1x8x128xf32>
    %6 = vector.shape_cast %5 : vector<1x8x128xf32> to vector<8x128xf32>
    %c0_1 = arith.constant 0 : index
    %7 = arith.index_cast %3 : i32 to index
    %c0_2 = arith.constant 0 : index
    %8 = vector.load %arg1[%c0_1, %7, %c0_2] : memref<29x8x128xf32, #tpu.memory_space<vmem>>, vector<1x8x128xf32>
    %9 = vector.shape_cast %8 : vector<1x8x128xf32> to vector<8x128xf32>
    %10 = arith.subf %6, %9 : vector<8x128xf32>
    %c16 = arith.constant 16 : index
    %11 = arith.index_cast %3 : i32 to index
    %c0_3 = arith.constant 0 : index
    %12 = vector.load %arg1[%c16, %11, %c0_3] : memref<29x8x128xf32, #tpu.memory_space<vmem>>, vector<1x8x128xf32>
    %13 = vector.shape_cast %12 : vector<1x8x128xf32> to vector<8x128xf32>
    %c7 = arith.constant 7 : index
    %14 = arith.index_cast %3 : i32 to index
    %c0_4 = arith.constant 0 : index
    %15 = vector.load %arg1[%c7, %14, %c0_4] : memref<29x8x128xf32, #tpu.memory_space<vmem>>, vector<1x8x128xf32>
    %16 = vector.shape_cast %15 : vector<1x8x128xf32> to vector<8x128xf32>
    %17 = arith.subf %13, %16 : vector<8x128xf32>
    %c20 = arith.constant 20 : index
    %18 = arith.index_cast %3 : i32 to index
    %c0_5 = arith.constant 0 : index
    %19 = vector.load %arg1[%c20, %18, %c0_5] : memref<29x8x128xf32, #tpu.memory_space<vmem>>, vector<1x8x128xf32>
    %20 = vector.shape_cast %19 : vector<1x8x128xf32> to vector<8x128xf32>
    %cst = arith.constant 0.00999999977 : f32
    %21 = vector.broadcast %cst : f32 to vector<8x128xf32>
    %22 = arith.mulf %10, %21 : vector<8x128xf32>
    %23 = arith.addf %20, %22 : vector<8x128xf32>
    %cst_6 = arith.constant -2.000000e+00 : f32
    %cst_7 = arith.constant 2.000000e+00 : f32
    %24 = vector.broadcast %cst_6 : f32 to vector<8x128xf32>
    %25 = arith.maximumf %24, %23 : vector<8x128xf32>
    %26 = vector.broadcast %cst_7 : f32 to vector<8x128xf32>
    %27 = arith.minimumf %26, %25 : vector<8x128xf32>
    %c4 = arith.constant 4 : index
    %28 = arith.index_cast %3 : i32 to index
    %c0_8 = arith.constant 0 : index
    %29 = vector.load %arg2[%c4, %28, %c0_8] : memref<7x8x128xf32, #tpu.memory_space<vmem>>, vector<1x8x128xf32>
    %30 = vector.shape_cast %29 : vector<1x8x128xf32> to vector<8x128xf32>
    %31 = vector.shape_cast %27 : vector<8x128xf32> to vector<1x8x128xf32>
    tpu.vector_store %arg2[%c4, %28, %c0_8], %31 {strides = array<i32>} : memref<7x8x128xf32, #tpu.memory_space<vmem>>, vector<1x8x128xf32>,
    %cst_9 = arith.constant 4.000000e-01 : f32
    %32 = vector.broadcast %cst_9 : f32 to vector<8x128xf32>
    %33 = arith.mulf %32, %10 : vector<8x128xf32>
    %cst_10 = arith.constant 5.000000e-02 : f32
    %34 = vector.broadcast %cst_10 : f32 to vector<8x128xf32>
    %35 = arith.mulf %34, %27 : vector<8x128xf32>
    %36 = arith.addf %33, %35 : vector<8x128xf32>
    %cst_11 = arith.constant 2.000000e-01 : f32
    %37 = vector.broadcast %cst_11 : f32 to vector<8x128xf32>
    %38 = arith.mulf %37, %17 : vector<8x128xf32>
    %39 = arith.addf %36, %38 : vector<8x128xf32>
    %cst_12 = arith.constant 0.000000e+00 : f32
    %40 = vector.broadcast %cst_12 : f32 to vector<8x128xf32>
    %41 = arith.addf %39, %40 : vector<8x128xf32>
    %c14 = arith.constant 14 : index
    %42 = arith.index_cast %3 : i32 to index
    %c0_13 = arith.constant 0 : index
    %43 = vector.load %arg1[%c14, %42, %c0_13] : memref<29x8x128xf32, #tpu.memory_space<vmem>>, vector<1x8x128xf32>
    %44 = vector.shape_cast %43 : vector<1x8x128xf32> to vector<8x128xf32>
    %c1 = arith.constant 1 : index
    %45 = arith.index_cast %3 : i32 to index
    %c0_14 = arith.constant 0 : index
    %46 = vector.load %arg1[%c1, %45, %c0_14] : memref<29x8x128xf32, #tpu.memory_space<vmem>>, vector<1x8x128xf32>
    %47 = vector.shape_cast %46 : vector<1x8x128xf32> to vector<8x128xf32>
    %48 = arith.subf %44, %47 : vector<8x128xf32>
    %c17 = arith.constant 17 : index
    %49 = arith.index_cast %3 : i32 to index
    %c0_15 = arith.constant 0 : index
    %50 = vector.load %arg1[%c17, %49, %c0_15] : memref<29x8x128xf32, #tpu.memory_space<vmem>>, vector<1x8x128xf32>
    %51 = vector.shape_cast %50 : vector<1x8x128xf32> to vector<8x128xf32>
    %c8 = arith.constant 8 : index
    %52 = arith.index_cast %3 : i32 to index
    %c0_16 = arith.constant 0 : index
    %53 = vector.load %arg1[%c8, %52, %c0_16] : memref<29x8x128xf32, #tpu.memory_space<vmem>>, vector<1x8x128xf32>
    %54 = vector.shape_cast %53 : vector<1x8x128xf32> to vector<8x128xf32>
    %55 = arith.subf %51, %54 : vector<8x128xf32>
    %c21 = arith.constant 21 : index
    %56 = arith.index_cast %3 : i32 to index
    %c0_17 = arith.constant 0 : index
    %57 = vector.load %arg1[%c21, %56, %c0_17] : memref<29x8x128xf32, #tpu.memory_space<vmem>>, vector<1x8x128xf32>
    %58 = vector.shape_cast %57 : vector<1x8x128xf32> to vector<8x128xf32>
    %cst_18 = arith.constant 0.00999999977 : f32
    %59 = vector.broadcast %cst_18 : f32 to vector<8x128xf32>
    %60 = arith.mulf %48, %59 : vector<8x128xf32>
    %61 = arith.addf %58, %60 : vector<8x128xf32>
    %cst_19 = arith.constant -2.000000e+00 : f32
    %cst_20 = arith.constant 2.000000e+00 : f32
    %62 = vector.broadcast %cst_19 : f32 to vector<8x128xf32>
    %63 = arith.maximumf %62, %61 : vector<8x128xf32>
    %64 = vector.broadcast %cst_20 : f32 to vector<8x128xf32>
    %65 = arith.minimumf %64, %63 : vector<8x128xf32>
    %c5 = arith.constant 5 : index
    %66 = arith.index_cast %3 : i32 to index
    %c0_21 = arith.constant 0 : index
    %67 = vector.load %arg2[%c5, %66, %c0_21] : memref<7x8x128xf32, #tpu.memory_space<vmem>>, vector<1x8x128xf32>
    %68 = vector.shape_cast %67 : vector<1x8x128xf32> to vector<8x128xf32>
    %69 = vector.shape_cast %65 : vector<8x128xf32> to vector<1x8x128xf32>
    tpu.vector_store %arg2[%c5, %66, %c0_21], %69 {strides = array<i32>} : memref<7x8x128xf32, #tpu.memory_space<vmem>>, vector<1x8x128xf32>,
    %cst_22 = arith.constant 4.000000e-01 : f32
    %70 = vector.broadcast %cst_22 : f32 to vector<8x128xf32>
    %71 = arith.mulf %70, %48 : vector<8x128xf32>
    %cst_23 = arith.constant 5.000000e-02 : f32
    %72 = vector.broadcast %cst_23 : f32 to vector<8x128xf32>
    %73 = arith.mulf %72, %65 : vector<8x128xf32>
    %74 = arith.addf %71, %73 : vector<8x128xf32>
    %cst_24 = arith.constant 2.000000e-01 : f32
    %75 = vector.broadcast %cst_24 : f32 to vector<8x128xf32>
    %76 = arith.mulf %75, %55 : vector<8x128xf32>
    %77 = arith.addf %74, %76 : vector<8x128xf32>
    %cst_25 = arith.constant 0.000000e+00 : f32
    %78 = vector.broadcast %cst_25 : f32 to vector<8x128xf32>
    %79 = arith.addf %77, %78 : vector<8x128xf32>
    %c15 = arith.constant 15 : index
    %80 = arith.index_cast %3 : i32 to index
    %c0_26 = arith.constant 0 : index
    %81 = vector.load %arg1[%c15, %80, %c0_26] : memref<29x8x128xf32, #tpu.memory_space<vmem>>, vector<1x8x128xf32>
    %82 = vector.shape_cast %81 : vector<1x8x128xf32> to vector<8x128xf32>
    %c2 = arith.constant 2 : index
    %83 = arith.index_cast %3 : i32 to index
    %c0_27 = arith.constant 0 : index
    %84 = vector.load %arg1[%c2, %83, %c0_27] : memref<29x8x128xf32, #tpu.memory_space<vmem>>, vector<1x8x128xf32>
    %85 = vector.shape_cast %84 : vector<1x8x128xf32> to vector<8x128xf32>
    %86 = arith.subf %82, %85 : vector<8x128xf32>
    %c18 = arith.constant 18 : index
    %87 = arith.index_cast %3 : i32 to index
    %c0_28 = arith.constant 0 : index
    %88 = vector.load %arg1[%c18, %87, %c0_28] : memref<29x8x128xf32, #tpu.memory_space<vmem>>, vector<1x8x128xf32>
    %89 = vector.shape_cast %88 : vector<1x8x128xf32> to vector<8x128xf32>
    %c9 = arith.constant 9 : index
    %90 = arith.index_cast %3 : i32 to index
    %c0_29 = arith.constant 0 : index
    %91 = vector.load %arg1[%c9, %90, %c0_29] : memref<29x8x128xf32, #tpu.memory_space<vmem>>, vector<1x8x128xf32>
    %92 = vector.shape_cast %91 : vector<1x8x128xf32> to vector<8x128xf32>
    %93 = arith.subf %89, %92 : vector<8x128xf32>
    %c22 = arith.constant 22 : index
    %94 = arith.index_cast %3 : i32 to index
    %c0_30 = arith.constant 0 : index
    %95 = vector.load %arg1[%c22, %94, %c0_30] : memref<29x8x128xf32, #tpu.memory_space<vmem>>, vector<1x8x128xf32>
    %96 = vector.shape_cast %95 : vector<1x8x128xf32> to vector<8x128xf32>
    %cst_31 = arith.constant 0.00999999977 : f32
    %97 = vector.broadcast %cst_31 : f32 to vector<8x128xf32>
    %98 = arith.mulf %86, %97 : vector<8x128xf32>
    %99 = arith.addf %96, %98 : vector<8x128xf32>
    %cst_32 = arith.constant -2.000000e+00 : f32
    %cst_33 = arith.constant 2.000000e+00 : f32
    %100 = vector.broadcast %cst_32 : f32 to vector<8x128xf32>
    %101 = arith.maximumf %100, %99 : vector<8x128xf32>
    %102 = vector.broadcast %cst_33 : f32 to vector<8x128xf32>
    %103 = arith.minimumf %102, %101 : vector<8x128xf32>
    %c6 = arith.constant 6 : index
    %104 = arith.index_cast %3 : i32 to index
    %c0_34 = arith.constant 0 : index
    %105 = vector.load %arg2[%c6, %104, %c0_34] : memref<7x8x128xf32, #tpu.memory_space<vmem>>, vector<1x8x128xf32>
    %106 = vector.shape_cast %105 : vector<1x8x128xf32> to vector<8x128xf32>
    %107 = vector.shape_cast %103 : vector<8x128xf32> to vector<1x8x128xf32>
    tpu.vector_store %arg2[%c6, %104, %c0_34], %107 {strides = array<i32>} : memref<7x8x128xf32, #tpu.memory_space<vmem>>, vector<1x8x128xf32>,
    %cst_35 = arith.constant 1.250000e+00 : f32
    %108 = vector.broadcast %cst_35 : f32 to vector<8x128xf32>
    %109 = arith.mulf %108, %86 : vector<8x128xf32>
    %cst_36 = arith.constant 5.000000e-02 : f32
    %110 = vector.broadcast %cst_36 : f32 to vector<8x128xf32>
    %111 = arith.mulf %110, %103 : vector<8x128xf32>
    %112 = arith.addf %109, %111 : vector<8x128xf32>
    %cst_37 = arith.constant 5.000000e-01 : f32
    %113 = vector.broadcast %cst_37 : f32 to vector<8x128xf32>
    %114 = arith.mulf %113, %93 : vector<8x128xf32>
    %115 = arith.addf %112, %114 : vector<8x128xf32>
    %cst_38 = arith.constant 2.648700e-01 : f32
    %116 = vector.broadcast %cst_38 : f32 to vector<8x128xf32>
    %117 = arith.addf %115, %116 : vector<8x128xf32>
    %c19 = arith.constant 19 : index
    %118 = arith.index_cast %3 : i32 to index
    %c0_39 = arith.constant 0 : index
    %119 = vector.load %arg1[%c19, %118, %c0_39] : memref<29x8x128xf32, #tpu.memory_space<vmem>>, vector<1x8x128xf32>
    %120 = vector.shape_cast %119 : vector<1x8x128xf32> to vector<8x128xf32>
    %121 = math.cos %120 : vector<8x128xf32>
    %122 = math.sin %120 : vector<8x128xf32>
    %123 = arith.mulf %41, %41 : vector<8x128xf32>
    %124 = arith.mulf %79, %79 : vector<8x128xf32>
    %125 = arith.addf %123, %124 : vector<8x128xf32>
    %126 = arith.mulf %117, %117 : vector<8x128xf32>
    %127 = arith.addf %125, %126 : vector<8x128xf32>
    %128 = math.rsqrt %127 : vector<8x128xf32>
    %129 = arith.mulf %41, %128 : vector<8x128xf32>
    %130 = arith.mulf %79, %128 : vector<8x128xf32>
    %131 = arith.mulf %117, %128 : vector<8x128xf32>
    %cst_40 = arith.constant 0.000000e+00 : f32
    %132 = vector.broadcast %cst_40 : f32 to vector<8x128xf32>
    %133 = arith.subf %132, %131 : vector<8x128xf32>
    %134 = arith.mulf %133, %122 : vector<8x128xf32>
    %135 = arith.mulf %131, %121 : vector<8x128xf32>
    %136 = arith.mulf %129, %122 : vector<8x128xf32>
    %137 = arith.mulf %130, %121 : vector<8x128xf32>
    %138 = arith.subf %136, %137 : vector<8x128xf32>
    %139 = arith.mulf %134, %134 : vector<8x128xf32>
    %140 = arith.mulf %135, %135 : vector<8x128xf32>
    %141 = arith.addf %139, %140 : vector<8x128xf32>
    %142 = arith.mulf %138, %138 : vector<8x128xf32>
    %143 = arith.addf %141, %142 : vector<8x128xf32>
    %144 = math.rsqrt %143 : vector<8x128xf32>
    %145 = arith.mulf %134, %144 : vector<8x128xf32>
    %146 = arith.mulf %135, %144 : vector<8x128xf32>
    %147 = arith.mulf %138, %144 : vector<8x128xf32>
    %148 = arith.mulf %146, %131 : vector<8x128xf32>
    %149 = arith.mulf %147, %130 : vector<8x128xf32>
    %150 = arith.subf %148, %149 : vector<8x128xf32>
    %151 = arith.mulf %147, %129 : vector<8x128xf32>
    %152 = arith.mulf %145, %131 : vector<8x128xf32>
    %153 = arith.subf %151, %152 : vector<8x128xf32>
    %154 = arith.mulf %145, %130 : vector<8x128xf32>
    %155 = arith.mulf %146, %129 : vector<8x128xf32>
    %156 = arith.subf %154, %155 : vector<8x128xf32>
    %c3 = arith.constant 3 : index
    %157 = arith.index_cast %3 : i32 to index
    %c0_41 = arith.constant 0 : index
    %158 = vector.load %arg1[%c3, %157, %c0_41] : memref<29x8x128xf32, #tpu.memory_space<vmem>>, vector<1x8x128xf32>
    %159 = vector.shape_cast %158 : vector<1x8x128xf32> to vector<8x128xf32>
    %c4_42 = arith.constant 4 : index
    %160 = arith.index_cast %3 : i32 to index
    %c0_43 = arith.constant 0 : index
    %161 = vector.load %arg1[%c4_42, %160, %c0_43] : memref<29x8x128xf32, #tpu.memory_space<vmem>>, vector<1x8x128xf32>
    %162 = vector.shape_cast %161 : vector<1x8x128xf32> to vector<8x128xf32>
    %c5_44 = arith.constant 5 : index
    %163 = arith.index_cast %3 : i32 to index
    %c0_45 = arith.constant 0 : index
    %164 = vector.load %arg1[%c5_44, %163, %c0_45] : memref<29x8x128xf32, #tpu.memory_space<vmem>>, vector<1x8x128xf32>
    %165 = vector.shape_cast %164 : vector<1x8x128xf32> to vector<8x128xf32>
    %c6_46 = arith.constant 6 : index
    %166 = arith.index_cast %3 : i32 to index
    %c0_47 = arith.constant 0 : index
    %167 = vector.load %arg1[%c6_46, %166, %c0_47] : memref<29x8x128xf32, #tpu.memory_space<vmem>>, vector<1x8x128xf32>
    %168 = vector.shape_cast %167 : vector<1x8x128xf32> to vector<8x128xf32>
    %169 = arith.mulf %165, %165 : vector<8x128xf32>
    %170 = arith.mulf %168, %168 : vector<8x128xf32>
    %171 = arith.addf %169, %170 : vector<8x128xf32>
    %cst_48 = arith.constant 2.000000e+00 : f32
    %172 = vector.broadcast %cst_48 : f32 to vector<8x128xf32>
    %173 = arith.mulf %172, %171 : vector<8x128xf32>
    %cst_49 = arith.constant 1.000000e+00 : f32
    %174 = vector.broadcast %cst_49 : f32 to vector<8x128xf32>
    %175 = arith.subf %174, %173 : vector<8x128xf32>
    %176 = arith.mulf %162, %165 : vector<8x128xf32>
    %177 = arith.mulf %159, %168 : vector<8x128xf32>
    %178 = arith.addf %176, %177 : vector<8x128xf32>
    %cst_50 = arith.constant 2.000000e+00 : f32
    %179 = vector.broadcast %cst_50 : f32 to vector<8x128xf32>
    %180 = arith.mulf %179, %178 : vector<8x128xf32>
    %181 = arith.mulf %162, %168 : vector<8x128xf32>
    %182 = arith.mulf %159, %165 : vector<8x128xf32>
    %183 = arith.subf %181, %182 : vector<8x128xf32>
    %cst_51 = arith.constant 2.000000e+00 : f32
    %184 = vector.broadcast %cst_51 : f32 to vector<8x128xf32>
    %185 = arith.mulf %184, %183 : vector<8x128xf32>
    %186 = arith.mulf %162, %165 : vector<8x128xf32>
    %187 = arith.mulf %159, %168 : vector<8x128xf32>
    %188 = arith.subf %186, %187 : vector<8x128xf32>
    %cst_52 = arith.constant 2.000000e+00 : f32
    %189 = vector.broadcast %cst_52 : f32 to vector<8x128xf32>
    %190 = arith.mulf %189, %188 : vector<8x128xf32>
    %191 = arith.mulf %162, %162 : vector<8x128xf32>
    %192 = arith.mulf %168, %168 : vector<8x128xf32>
    %193 = arith.addf %191, %192 : vector<8x128xf32>
    %cst_53 = arith.constant 2.000000e+00 : f32
    %194 = vector.broadcast %cst_53 : f32 to vector<8x128xf32>
    %195 = arith.mulf %194, %193 : vector<8x128xf32>
    %cst_54 = arith.constant 1.000000e+00 : f32
    %196 = vector.broadcast %cst_54 : f32 to vector<8x128xf32>
    %197 = arith.subf %196, %195 : vector<8x128xf32>
    %198 = arith.mulf %165, %168 : vector<8x128xf32>
    %199 = arith.mulf %159, %162 : vector<8x128xf32>
    %200 = arith.addf %198, %199 : vector<8x128xf32>
    %cst_55 = arith.constant 2.000000e+00 : f32
    %201 = vector.broadcast %cst_55 : f32 to vector<8x128xf32>
    %202 = arith.mulf %201, %200 : vector<8x128xf32>
    %203 = arith.mulf %162, %168 : vector<8x128xf32>
    %204 = arith.mulf %159, %165 : vector<8x128xf32>
    %205 = arith.addf %203, %204 : vector<8x128xf32>
    %cst_56 = arith.constant 2.000000e+00 : f32
    %206 = vector.broadcast %cst_56 : f32 to vector<8x128xf32>
    %207 = arith.mulf %206, %205 : vector<8x128xf32>
    %208 = arith.mulf %165, %168 : vector<8x128xf32>
    %209 = arith.mulf %159, %162 : vector<8x128xf32>
    %210 = arith.subf %208, %209 : vector<8x128xf32>
    %cst_57 = arith.constant 2.000000e+00 : f32
    %211 = vector.broadcast %cst_57 : f32 to vector<8x128xf32>
    %212 = arith.mulf %211, %210 : vector<8x128xf32>
    %213 = arith.mulf %162, %162 : vector<8x128xf32>
    %214 = arith.mulf %165, %165 : vector<8x128xf32>
    %215 = arith.addf %213, %214 : vector<8x128xf32>
    %cst_58 = arith.constant 2.000000e+00 : f32
    %216 = vector.broadcast %cst_58 : f32 to vector<8x128xf32>
    %217 = arith.mulf %216, %215 : vector<8x128xf32>
    %cst_59 = arith.constant 1.000000e+00 : f32
    %218 = vector.broadcast %cst_59 : f32 to vector<8x128xf32>
    %219 = arith.subf %218, %217 : vector<8x128xf32>
    %220 = arith.mulf %41, %207 : vector<8x128xf32>
    %221 = arith.mulf %79, %212 : vector<8x128xf32>
    %222 = arith.addf %220, %221 : vector<8x128xf32>
    %223 = arith.mulf %117, %219 : vector<8x128xf32>
    %224 = arith.addf %222, %223 : vector<8x128xf32>
    %cst_60 = arith.constant 0x4E3C9F4F : f32
    %225 = vector.broadcast %cst_60 : f32 to vector<8x128xf32>
    %226 = arith.mulf %224, %225 : vector<8x128xf32>
    %227 = math.sqrt %226 : vector<8x128xf32>
    %cst_61 = arith.constant 4.070300e+03 : f32
    %228 = vector.broadcast %cst_61 : f32 to vector<8x128xf32>
    %229 = arith.subf %227, %228 : vector<8x128xf32>
    %cst_62 = arith.constant 3.7243948 : f32
    %230 = vector.broadcast %cst_62 : f32 to vector<8x128xf32>
    %231 = arith.mulf %229, %230 : vector<8x128xf32>
    %232 = arith.mulf %129, %190 : vector<8x128xf32>
    %233 = arith.mulf %130, %197 : vector<8x128xf32>
    %234 = arith.addf %232, %233 : vector<8x128xf32>
    %235 = arith.mulf %131, %202 : vector<8x128xf32>
    %236 = arith.addf %234, %235 : vector<8x128xf32>
    %237 = arith.mulf %207, %145 : vector<8x128xf32>
    %238 = arith.mulf %212, %146 : vector<8x128xf32>
    %239 = arith.addf %237, %238 : vector<8x128xf32>
    %240 = arith.mulf %219, %147 : vector<8x128xf32>
    %241 = arith.addf %239, %240 : vector<8x128xf32>
    %242 = arith.subf %236, %241 : vector<8x128xf32>
    %243 = arith.mulf %150, %207 : vector<8x128xf32>
    %244 = arith.mulf %153, %212 : vector<8x128xf32>
    %245 = arith.addf %243, %244 : vector<8x128xf32>
    %246 = arith.mulf %156, %219 : vector<8x128xf32>
    %247 = arith.addf %245, %246 : vector<8x128xf32>
    %248 = arith.mulf %175, %129 : vector<8x128xf32>
    %249 = arith.mulf %180, %130 : vector<8x128xf32>
    %250 = arith.addf %248, %249 : vector<8x128xf32>
    %251 = arith.mulf %185, %131 : vector<8x128xf32>
    %252 = arith.addf %250, %251 : vector<8x128xf32>
    %253 = arith.subf %247, %252 : vector<8x128xf32>
    %254 = arith.mulf %145, %175 : vector<8x128xf32>
    %255 = arith.mulf %146, %180 : vector<8x128xf32>
    %256 = arith.addf %254, %255 : vector<8x128xf32>
    %257 = arith.mulf %147, %185 : vector<8x128xf32>
    %258 = arith.addf %256, %257 : vector<8x128xf32>
    %259 = arith.mulf %190, %150 : vector<8x128xf32>
    %260 = arith.mulf %197, %153 : vector<8x128xf32>
    %261 = arith.addf %259, %260 : vector<8x128xf32>
    %262 = arith.mulf %202, %156 : vector<8x128xf32>
    %263 = arith.addf %261, %262 : vector<8x128xf32>
    %264 = arith.subf %258, %263 : vector<8x128xf32>
    %c10 = arith.constant 10 : index
    %265 = arith.index_cast %3 : i32 to index
    %c0_63 = arith.constant 0 : index
    %266 = vector.load %arg1[%c10, %265, %c0_63] : memref<29x8x128xf32, #tpu.memory_space<vmem>>, vector<1x8x128xf32>
    %267 = vector.shape_cast %266 : vector<1x8x128xf32> to vector<8x128xf32>
    %c26 = arith.constant 26 : index
    %268 = arith.index_cast %3 : i32 to index
    %c0_64 = arith.constant 0 : index
    %269 = vector.load %arg1[%c26, %268, %c0_64] : memref<29x8x128xf32, #tpu.memory_space<vmem>>, vector<1x8x128xf32>
    %270 = vector.shape_cast %269 : vector<1x8x128xf32> to vector<8x128xf32>
    %271 = arith.subf %267, %270 : vector<8x128xf32>
    %cst_65 = arith.constant 0.000000e+00 : f32
    %272 = vector.broadcast %cst_65 : f32 to vector<8x128xf32>
    %273 = arith.subf %272, %271 : vector<8x128xf32>
    %cst_66 = arith.constant 1.000000e+02 : f32
    %274 = vector.broadcast %cst_66 : f32 to vector<8x128xf32>
    %275 = arith.mulf %273, %274 : vector<8x128xf32>
    %c23 = arith.constant 23 : index
    %276 = arith.index_cast %3 : i32 to index
    %c0_67 = arith.constant 0 : index
    %277 = vector.load %arg1[%c23, %276, %c0_67] : memref<29x8x128xf32, #tpu.memory_space<vmem>>, vector<1x8x128xf32>
    %278 = vector.shape_cast %277 : vector<1x8x128xf32> to vector<8x128xf32>
    %cst_68 = arith.constant 0.00999999977 : f32
    %279 = vector.broadcast %cst_68 : f32 to vector<8x128xf32>
    %280 = arith.mulf %242, %279 : vector<8x128xf32>
    %281 = arith.subf %278, %280 : vector<8x128xf32>
    %cst_69 = arith.constant -7.000000e+04 : f32
    %282 = vector.broadcast %cst_69 : f32 to vector<8x128xf32>
    %283 = arith.mulf %282, %242 : vector<8x128xf32>
    %cst_70 = arith.constant 2.000000e+04 : f32
    %284 = vector.broadcast %cst_70 : f32 to vector<8x128xf32>
    %285 = arith.mulf %284, %275 : vector<8x128xf32>
    %286 = arith.addf %283, %285 : vector<8x128xf32>
    %cst_71 = arith.constant 0.000000e+00 : f32
    %287 = vector.broadcast %cst_71 : f32 to vector<8x128xf32>
    %288 = arith.mulf %287, %281 : vector<8x128xf32>
    %289 = arith.addf %286, %288 : vector<8x128xf32>
    %c11 = arith.constant 11 : index
    %290 = arith.index_cast %3 : i32 to index
    %c0_72 = arith.constant 0 : index
    %291 = vector.load %arg1[%c11, %290, %c0_72] : memref<29x8x128xf32, #tpu.memory_space<vmem>>, vector<1x8x128xf32>
    %292 = vector.shape_cast %291 : vector<1x8x128xf32> to vector<8x128xf32>
    %c27 = arith.constant 27 : index
    %293 = arith.index_cast %3 : i32 to index
    %c0_73 = arith.constant 0 : index
    %294 = vector.load %arg1[%c27, %293, %c0_73] : memref<29x8x128xf32, #tpu.memory_space<vmem>>, vector<1x8x128xf32>
    %295 = vector.shape_cast %294 : vector<1x8x128xf32> to vector<8x128xf32>
    %296 = arith.subf %292, %295 : vector<8x128xf32>
    %cst_74 = arith.constant 0.000000e+00 : f32
    %297 = vector.broadcast %cst_74 : f32 to vector<8x128xf32>
    %298 = arith.subf %297, %296 : vector<8x128xf32>
    %cst_75 = arith.constant 1.000000e+02 : f32
    %299 = vector.broadcast %cst_75 : f32 to vector<8x128xf32>
    %300 = arith.mulf %298, %299 : vector<8x128xf32>
    %c24 = arith.constant 24 : index
    %301 = arith.index_cast %3 : i32 to index
    %c0_76 = arith.constant 0 : index
    %302 = vector.load %arg1[%c24, %301, %c0_76] : memref<29x8x128xf32, #tpu.memory_space<vmem>>, vector<1x8x128xf32>
    %303 = vector.shape_cast %302 : vector<1x8x128xf32> to vector<8x128xf32>
    %cst_77 = arith.constant 0.00999999977 : f32
    %304 = vector.broadcast %cst_77 : f32 to vector<8x128xf32>
    %305 = arith.mulf %253, %304 : vector<8x128xf32>
    %306 = arith.subf %303, %305 : vector<8x128xf32>
    %cst_78 = arith.constant -7.000000e+04 : f32
    %307 = vector.broadcast %cst_78 : f32 to vector<8x128xf32>
    %308 = arith.mulf %307, %253 : vector<8x128xf32>
    %cst_79 = arith.constant 2.000000e+04 : f32
    %309 = vector.broadcast %cst_79 : f32 to vector<8x128xf32>
    %310 = arith.mulf %309, %300 : vector<8x128xf32>
    %311 = arith.addf %308, %310 : vector<8x128xf32>
    %cst_80 = arith.constant 0.000000e+00 : f32
    %312 = vector.broadcast %cst_80 : f32 to vector<8x128xf32>
    %313 = arith.mulf %312, %306 : vector<8x128xf32>
    %314 = arith.addf %311, %313 : vector<8x128xf32>
    %c12 = arith.constant 12 : index
    %315 = arith.index_cast %3 : i32 to index
    %c0_81 = arith.constant 0 : index
    %316 = vector.load %arg1[%c12, %315, %c0_81] : memref<29x8x128xf32, #tpu.memory_space<vmem>>, vector<1x8x128xf32>
    %317 = vector.shape_cast %316 : vector<1x8x128xf32> to vector<8x128xf32>
    %c28 = arith.constant 28 : index
    %318 = arith.index_cast %3 : i32 to index
    %c0_82 = arith.constant 0 : index
    %319 = vector.load %arg1[%c28, %318, %c0_82] : memref<29x8x128xf32, #tpu.memory_space<vmem>>, vector<1x8x128xf32>
    %320 = vector.shape_cast %319 : vector<1x8x128xf32> to vector<8x128xf32>
    %321 = arith.subf %317, %320 : vector<8x128xf32>
    %cst_83 = arith.constant 0.000000e+00 : f32
    %322 = vector.broadcast %cst_83 : f32 to vector<8x128xf32>
    %323 = arith.subf %322, %321 : vector<8x128xf32>
    %cst_84 = arith.constant 1.000000e+02 : f32
    %324 = vector.broadcast %cst_84 : f32 to vector<8x128xf32>
    %325 = arith.mulf %323, %324 : vector<8x128xf32>
    %c25 = arith.constant 25 : index
    %326 = arith.index_cast %3 : i32 to index
    %c0_85 = arith.constant 0 : index
    %327 = vector.load %arg1[%c25, %326, %c0_85] : memref<29x8x128xf32, #tpu.memory_space<vmem>>, vector<1x8x128xf32>
    %328 = vector.shape_cast %327 : vector<1x8x128xf32> to vector<8x128xf32>
    %cst_86 = arith.constant 0.00999999977 : f32
    %329 = vector.broadcast %cst_86 : f32 to vector<8x128xf32>
    %330 = arith.mulf %264, %329 : vector<8x128xf32>
    %331 = arith.subf %328, %330 : vector<8x128xf32>
    %cst_87 = arith.constant -6.000000e+04 : f32
    %332 = vector.broadcast %cst_87 : f32 to vector<8x128xf32>
    %333 = arith.mulf %332, %264 : vector<8x128xf32>
    %cst_88 = arith.constant 1.200000e+04 : f32
    %334 = vector.broadcast %cst_88 : f32 to vector<8x128xf32>
    %335 = arith.mulf %334, %325 : vector<8x128xf32>
    %336 = arith.addf %333, %335 : vector<8x128xf32>
    %cst_89 = arith.constant 5.000000e+02 : f32
    %337 = vector.broadcast %cst_89 : f32 to vector<8x128xf32>
    %338 = arith.mulf %337, %331 : vector<8x128xf32>
    %339 = arith.addf %336, %338 : vector<8x128xf32>
    %cst_90 = arith.constant -5.000000e-01 : f32
    %340 = vector.broadcast %cst_90 : f32 to vector<8x128xf32>
    %341 = arith.mulf %340, %289 : vector<8x128xf32>
    %cst_91 = arith.constant -5.000000e-01 : f32
    %342 = vector.broadcast %cst_91 : f32 to vector<8x128xf32>
    %343 = arith.mulf %342, %314 : vector<8x128xf32>
    %344 = arith.addf %341, %343 : vector<8x128xf32>
    %cst_92 = arith.constant 1.000000e+00 : f32
    %345 = vector.broadcast %cst_92 : f32 to vector<8x128xf32>
    %346 = arith.mulf %345, %339 : vector<8x128xf32>
    %347 = arith.addf %344, %346 : vector<8x128xf32>
    %348 = arith.addf %231, %347 : vector<8x128xf32>
    %cst_93 = arith.constant 0.000000e+00 : f32
    %cst_94 = arith.constant 6.553500e+04 : f32
    %349 = vector.broadcast %cst_93 : f32 to vector<8x128xf32>
    %350 = arith.maximumf %349, %348 : vector<8x128xf32>
    %351 = vector.broadcast %cst_94 : f32 to vector<8x128xf32>
    %352 = arith.minimumf %351, %350 : vector<8x128xf32>
    %cst_95 = arith.constant 2.685000e-01 : f32
    %353 = vector.broadcast %cst_95 : f32 to vector<8x128xf32>
    %354 = arith.mulf %353, %352 : vector<8x128xf32>
    %cst_96 = arith.constant 4.070300e+03 : f32
    %355 = vector.broadcast %cst_96 : f32 to vector<8x128xf32>
    %356 = arith.addf %354, %355 : vector<8x128xf32>
    %cst_97 = arith.constant 4.60532392E-5 : f32
    %357 = vector.broadcast %cst_97 : f32 to vector<8x128xf32>
    %358 = arith.mulf %356, %357 : vector<8x128xf32>
    %359 = arith.mulf %358, %358 : vector<8x128xf32>
    %cst_98 = arith.constant 2.000000e+00 : f32
    %360 = vector.broadcast %cst_98 : f32 to vector<8x128xf32>
    %361 = arith.mulf %359, %360 : vector<8x128xf32>
    %cst_99 = arith.constant 1.000000e+00 : f32
    %362 = vector.broadcast %cst_99 : f32 to vector<8x128xf32>
    %363 = arith.subf %361, %362 : vector<8x128xf32>
    %c0_100 = arith.constant 0 : index
    %364 = arith.index_cast %3 : i32 to index
    %c0_101 = arith.constant 0 : index
    %365 = vector.load %arg2[%c0_100, %364, %c0_101] : memref<7x8x128xf32, #tpu.memory_space<vmem>>, vector<1x8x128xf32>
    %366 = vector.shape_cast %365 : vector<1x8x128xf32> to vector<8x128xf32>
    %367 = vector.shape_cast %363 : vector<8x128xf32> to vector<1x8x128xf32>
    tpu.vector_store %arg2[%c0_100, %364, %c0_101], %367 {strides = array<i32>} : memref<7x8x128xf32, #tpu.memory_space<vmem>>, vector<1x8x128xf32>,
    %cst_102 = arith.constant -5.000000e-01 : f32
    %368 = vector.broadcast %cst_102 : f32 to vector<8x128xf32>
    %369 = arith.mulf %368, %289 : vector<8x128xf32>
    %cst_103 = arith.constant 5.000000e-01 : f32
    %370 = vector.broadcast %cst_103 : f32 to vector<8x128xf32>
    %371 = arith.mulf %370, %314 : vector<8x128xf32>
    %372 = arith.addf %369, %371 : vector<8x128xf32>
    %cst_104 = arith.constant -1.000000e+00 : f32
    %373 = vector.broadcast %cst_104 : f32 to vector<8x128xf32>
    %374 = arith.mulf %373, %339 : vector<8x128xf32>
    %375 = arith.addf %372, %374 : vector<8x128xf32>
    %376 = arith.addf %231, %375 : vector<8x128xf32>
    %cst_105 = arith.constant 0.000000e+00 : f32
    %cst_106 = arith.constant 6.553500e+04 : f32
    %377 = vector.broadcast %cst_105 : f32 to vector<8x128xf32>
    %378 = arith.maximumf %377, %376 : vector<8x128xf32>
    %379 = vector.broadcast %cst_106 : f32 to vector<8x128xf32>
    %380 = arith.minimumf %379, %378 : vector<8x128xf32>
    %cst_107 = arith.constant 2.685000e-01 : f32
    %381 = vector.broadcast %cst_107 : f32 to vector<8x128xf32>
    %382 = arith.mulf %381, %380 : vector<8x128xf32>
    %cst_108 = arith.constant 4.070300e+03 : f32
    %383 = vector.broadcast %cst_108 : f32 to vector<8x128xf32>
    %384 = arith.addf %382, %383 : vector<8x128xf32>
    %cst_109 = arith.constant 4.60532392E-5 : f32
    %385 = vector.broadcast %cst_109 : f32 to vector<8x128xf32>
    %386 = arith.mulf %384, %385 : vector<8x128xf32>
    %387 = arith.mulf %386, %386 : vector<8x128xf32>
    %cst_110 = arith.constant 2.000000e+00 : f32
    %388 = vector.broadcast %cst_110 : f32 to vector<8x128xf32>
    %389 = arith.mulf %387, %388 : vector<8x128xf32>
    %cst_111 = arith.constant 1.000000e+00 : f32
    %390 = vector.broadcast %cst_111 : f32 to vector<8x128xf32>
    %391 = arith.subf %389, %390 : vector<8x128xf32>
    %c1_112 = arith.constant 1 : index
    %392 = arith.index_cast %3 : i32 to index
    %c0_113 = arith.constant 0 : index
    %393 = vector.load %arg2[%c1_112, %392, %c0_113] : memref<7x8x128xf32, #tpu.memory_space<vmem>>, vector<1x8x128xf32>
    %394 = vector.shape_cast %393 : vector<1x8x128xf32> to vector<8x128xf32>
    %395 = vector.shape_cast %391 : vector<8x128xf32> to vector<1x8x128xf32>
    tpu.vector_store %arg2[%c1_112, %392, %c0_113], %395 {strides = array<i32>} : memref<7x8x128xf32, #tpu.memory_space<vmem>>, vector<1x8x128xf32>,
    %cst_114 = arith.constant 5.000000e-01 : f32
    %396 = vector.broadcast %cst_114 : f32 to vector<8x128xf32>
    %397 = arith.mulf %396, %289 : vector<8x128xf32>
    %cst_115 = arith.constant 5.000000e-01 : f32
    %398 = vector.broadcast %cst_115 : f32 to vector<8x128xf32>
    %399 = arith.mulf %398, %314 : vector<8x128xf32>
    %400 = arith.addf %397, %399 : vector<8x128xf32>
    %cst_116 = arith.constant 1.000000e+00 : f32
    %401 = vector.broadcast %cst_116 : f32 to vector<8x128xf32>
    %402 = arith.mulf %401, %339 : vector<8x128xf32>
    %403 = arith.addf %400, %402 : vector<8x128xf32>
    %404 = arith.addf %231, %403 : vector<8x128xf32>
    %cst_117 = arith.constant 0.000000e+00 : f32
    %cst_118 = arith.constant 6.553500e+04 : f32
    %405 = vector.broadcast %cst_117 : f32 to vector<8x128xf32>
    %406 = arith.maximumf %405, %404 : vector<8x128xf32>
    %407 = vector.broadcast %cst_118 : f32 to vector<8x128xf32>
    %408 = arith.minimumf %407, %406 : vector<8x128xf32>
    %cst_119 = arith.constant 2.685000e-01 : f32
    %409 = vector.broadcast %cst_119 : f32 to vector<8x128xf32>
    %410 = arith.mulf %409, %408 : vector<8x128xf32>
    %cst_120 = arith.constant 4.070300e+03 : f32
    %411 = vector.broadcast %cst_120 : f32 to vector<8x128xf32>
    %412 = arith.addf %410, %411 : vector<8x128xf32>
    %cst_121 = arith.constant 4.60532392E-5 : f32
    %413 = vector.broadcast %cst_121 : f32 to vector<8x128xf32>
    %414 = arith.mulf %412, %413 : vector<8x128xf32>
    %415 = arith.mulf %414, %414 : vector<8x128xf32>
    %cst_122 = arith.constant 2.000000e+00 : f32
    %416 = vector.broadcast %cst_122 : f32 to vector<8x128xf32>
    %417 = arith.mulf %415, %416 : vector<8x128xf32>
    %cst_123 = arith.constant 1.000000e+00 : f32
    %418 = vector.broadcast %cst_123 : f32 to vector<8x128xf32>
    %419 = arith.subf %417, %418 : vector<8x128xf32>
    %c2_124 = arith.constant 2 : index
    %420 = arith.index_cast %3 : i32 to index
    %c0_125 = arith.constant 0 : index
    %421 = vector.load %arg2[%c2_124, %420, %c0_125] : memref<7x8x128xf32, #tpu.memory_space<vmem>>, vector<1x8x128xf32>
    %422 = vector.shape_cast %421 : vector<1x8x128xf32> to vector<8x128xf32>
    %423 = vector.shape_cast %419 : vector<8x128xf32> to vector<1x8x128xf32>
    tpu.vector_store %arg2[%c2_124, %420, %c0_125], %423 {strides = array<i32>} : memref<7x8x128xf32, #tpu.memory_space<vmem>>, vector<1x8x128xf32>,
    %cst_126 = arith.constant 5.000000e-01 : f32
    %424 = vector.broadcast %cst_126 : f32 to vector<8x128xf32>
    %425 = arith.mulf %424, %289 : vector<8x128xf32>
    %cst_127 = arith.constant -5.000000e-01 : f32
    %426 = vector.broadcast %cst_127 : f32 to vector<8x128xf32>
    %427 = arith.mulf %426, %314 : vector<8x128xf32>
    %428 = arith.addf %425, %427 : vector<8x128xf32>
    %cst_128 = arith.constant -1.000000e+00 : f32
    %429 = vector.broadcast %cst_128 : f32 to vector<8x128xf32>
    %430 = arith.mulf %429, %339 : vector<8x128xf32>
    %431 = arith.addf %428, %430 : vector<8x128xf32>
    %432 = arith.addf %231, %431 : vector<8x128xf32>
    %cst_129 = arith.constant 0.000000e+00 : f32
    %cst_130 = arith.constant 6.553500e+04 : f32
    %433 = vector.broadcast %cst_129 : f32 to vector<8x128xf32>
    %434 = arith.maximumf %433, %432 : vector<8x128xf32>
    %435 = vector.broadcast %cst_130 : f32 to vector<8x128xf32>
    %436 = arith.minimumf %435, %434 : vector<8x128xf32>
    %cst_131 = arith.constant 2.685000e-01 : f32
    %437 = vector.broadcast %cst_131 : f32 to vector<8x128xf32>
    %438 = arith.mulf %437, %436 : vector<8x128xf32>
    %cst_132 = arith.constant 4.070300e+03 : f32
    %439 = vector.broadcast %cst_132 : f32 to vector<8x128xf32>
    %440 = arith.addf %438, %439 : vector<8x128xf32>
    %cst_133 = arith.constant 4.60532392E-5 : f32
    %441 = vector.broadcast %cst_133 : f32 to vector<8x128xf32>
    %442 = arith.mulf %440, %441 : vector<8x128xf32>
    %443 = arith.mulf %442, %442 : vector<8x128xf32>
    %cst_134 = arith.constant 2.000000e+00 : f32
    %444 = vector.broadcast %cst_134 : f32 to vector<8x128xf32>
    %445 = arith.mulf %443, %444 : vector<8x128xf32>
    %cst_135 = arith.constant 1.000000e+00 : f32
    %446 = vector.broadcast %cst_135 : f32 to vector<8x128xf32>
    %447 = arith.subf %445, %446 : vector<8x128xf32>
    %c3_136 = arith.constant 3 : index
    %448 = arith.index_cast %3 : i32 to index
    %c0_137 = arith.constant 0 : index
    %449 = vector.load %arg2[%c3_136, %448, %c0_137] : memref<7x8x128xf32, #tpu.memory_space<vmem>>, vector<1x8x128xf32>
    %450 = vector.shape_cast %449 : vector<1x8x128xf32> to vector<8x128xf32>
    %451 = vector.shape_cast %447 : vector<8x128xf32> to vector<1x8x128xf32>
    tpu.vector_store %arg2[%c3_136, %448, %c0_137], %451 {strides = array<i32>} : memref<7x8x128xf32, #tpu.memory_space<vmem>>, vector<1x8x128xf32>,
    %c1_i32_138 = arith.constant 1 : i32
    return
  }
  func.func @transform_0(%arg0: i32) -> (i32, i32, i32) {
    %c0_i32 = arith.constant 0 : i32
    %c0_i32_0 = arith.constant 0 : i32
    %c0_i32_1 = arith.constant 0 : i32
    return %c0_i32, %arg0, %c0_i32_0 : i32, i32, i32
  }
  func.func @transform_1(%arg0: i32) -> (i32, i32, i32) {
    %c0_i32 = arith.constant 0 : i32
    %c0_i32_0 = arith.constant 0 : i32
    %c0_i32_1 = arith.constant 0 : i32
    return %c0_i32, %arg0, %c0_i32_0 : i32, i32, i32
  }
}

</mosaic_0001>

<llo_original>
// kernel: _forward.1
$region0: #{_forward.1}
  #allocation0 [shape = 'u32[]', space=smem, size = 0x4, offset = 0x4, fixed_abs, tag = 'smem constant byte address 0x4 - core index']
  #allocation1 [shape = 'u32[144,128]{1,0:T(1,128)}', space=vmem, size = 0x12000, scoped, tag = 'internal scratch']
  %s0 = inlined_call_operand.vmem [shape: f32[29,8,128], index: 0, kind: input, shape index: {}]
  %s1 = inlined_call_operand.vmem [shape: f32[7,8,128], index: 1, kind: output, shape index: {}]
  %s2 = sld [smem:[#allocation0]]
  $region14: #{_forward.1} parent=0
    _
  %s4 = ssub.s32 1, %s2
  %s5 = scalar_select 0, %s4, %s2
  // Predicated region
  $region2: #{_forward.1} parent=0 // pred_check
    _
  $region3: #{_forward.1} parent=0 // pred_check_branch
    %7 = sbr.rel (0) target = $region5
  $region4: #{_forward.1} parent=0 // pred_region
    _
  $region5: #{_forward.1} parent=0 // pred_fallthru
    _
  %s8 = sadd.s32 0, 104
  %s9 = scalar_lea.vmem %s0, %s8
  %v10 = vld [vmem:[%s9] sm:$0xff]
  %v11 = vld [vmem:[%s0] sm:$0xff]
  %v12 = vsub.f32 %v10, %v11
  %s13 = sadd.s32 0, 128
  %s14 = scalar_lea.vmem %s0, %s13
  %v15 = vld [vmem:[%s14] sm:$0xff]
  %s16 = sadd.s32 0, 56
  %s17 = scalar_lea.vmem %s0, %s16
  %v18 = vld [vmem:[%s17] sm:$0xff]
  %v19 = vsub.f32 %v15, %v18
  %s20 = sadd.s32 0, 160
  %s21 = scalar_lea.vmem %s0, %s20
  %v22 = vld [vmem:[%s21] sm:$0xff]
  %v23 = vmul.f32 %v12, 0.01
  %v24 = vadd.f32 %v22, %v23
  %v25 = vmax.f32 %v24, -2.0
  %v26 = vmin.f32 %v25, 2.0
  %s27 = sadd.s32 0, 32
  %s28 = scalar_lea.vmem %s1, %s27
  %29 = vst [vmem:[%s28] sm:$0xff] %v26
  %v30 = vmul.f32 %v12, 0.4
  %v31 = vmul.f32 %v26, 0.05
  %v32 = vadd.f32 %v30, %v31
  %v33 = vmul.f32 %v19, 0.2
  %v34 = vadd.f32 %v32, %v33
  %v35 = vadd.f32 %v34, 0.0
  %s36 = sadd.s32 0, 112
  %s37 = scalar_lea.vmem %s0, %s36
  %v38 = vld [vmem:[%s37] sm:$0xff]
  %s39 = sadd.s32 0, 8
  %s40 = scalar_lea.vmem %s0, %s39
  %v41 = vld [vmem:[%s40] sm:$0xff]
  %v42 = vsub.f32 %v38, %v41
  %s43 = sadd.s32 0, 136
  %s44 = scalar_lea.vmem %s0, %s43
  %v45 = vld [vmem:[%s44] sm:$0xff]
  %s46 = sadd.s32 0, 64
  %s47 = scalar_lea.vmem %s0, %s46
  %v48 = vld [vmem:[%s47] sm:$0xff]
  %v49 = vsub.f32 %v45, %v48
  %s50 = sadd.s32 0, 168
  %s51 = scalar_lea.vmem %s0, %s50
  %v52 = vld [vmem:[%s51] sm:$0xff]
  %v53 = vmul.f32 %v42, 0.01
  %v54 = vadd.f32 %v52, %v53
  %v55 = vmax.f32 %v54, -2.0
  %v56 = vmin.f32 %v55, 2.0
  %s57 = sadd.s32 0, 40
  %s58 = scalar_lea.vmem %s1, %s57
  %59 = vst [vmem:[%s58] sm:$0xff] %v56
  %v60 = vmul.f32 %v42, 0.4
  %v61 = vmul.f32 %v56, 0.05
  %v62 = vadd.f32 %v60, %v61
  %v63 = vmul.f32 %v49, 0.2
  %v64 = vadd.f32 %v62, %v63
  %v65 = vadd.f32 %v64, 0.0
  %s66 = sadd.s32 0, 120
  %s67 = scalar_lea.vmem %s0, %s66
  %v68 = vld [vmem:[%s67] sm:$0xff]
  %s69 = sadd.s32 0, 16
  %s70 = scalar_lea.vmem %s0, %s69
  %v71 = vld [vmem:[%s70] sm:$0xff]
  %v72 = vsub.f32 %v68, %v71
  %s73 = sadd.s32 0, 144
  %s74 = scalar_lea.vmem %s0, %s73
  %v75 = vld [vmem:[%s74] sm:$0xff]
  %s76 = sadd.s32 0, 72
  %s77 = scalar_lea.vmem %s0, %s76
  %v78 = vld [vmem:[%s77] sm:$0xff]
  %v79 = vsub.f32 %v75, %v78
  %s80 = sadd.s32 0, 176
  %s81 = scalar_lea.vmem %s0, %s80
  %v82 = vld [vmem:[%s81] sm:$0xff]
  %v83 = vmul.f32 %v72, 0.01
  %v84 = vadd.f32 %v82, %v83
  %v85 = vmax.f32 %v84, -2.0
  %v86 = vmin.f32 %v85, 2.0
  %s87 = sadd.s32 0, 48
  %s88 = scalar_lea.vmem %s1, %s87
  %89 = vst [vmem:[%s88] sm:$0xff] %v86
  %v90 = vmul.f32 %v72, 1.25
  %v91 = vmul.f32 %v86, 0.05
  %v92 = vadd.f32 %v90, %v91
  %v93 = vmul.f32 %v79, 0.5
  %v94 = vadd.f32 %v92, %v93
  %v95 = vadd.f32 %v94, 0.26487
  %s96 = sadd.s32 0, 152
  %s97 = scalar_lea.vmem %s0, %s96
  %v98 = vld [vmem:[%s97] sm:$0xff]
  %v99 = vand.u32 2147483647, %v98
  %vm100 = vcmp.le.f32.partialorder %v99, 0.7853982
  %vm101 = vcmp.lt.s32.totalorder %v98, 0
  %v102 = vand.u32 %v98, 2139095040
  %v103 = vshrl.u32 %v102, 23
  %v104 = vsub.s32 %v103, 127
  %v105 = vand.u32 2147483647, %v98
  %v106 = vand.u32 %v105, 8388607
  %v107 = vor.u32 %v106, 8388608
  %v108 = vsub.s32 0, %v107
  %v109 = vadd.s32 %v104, 1
  %vm110 = vcmp.gt.s32.totalorder %v109, 0
  %v111 = vsel %vm110, %v109, 0
  %v112 = vshrl.u32 %v111, 5
  %v113 = vand.u32 %v111, 31
  %v114 = vsub.s32 32, %v113
  %v115 = vshrl.u32 683565275, %v114
  %v116 = vshll.u32 683565275, %v113
  %v117 = vshrl.u32 2475754826, %v114
  %v118 = vor.u32 %v116, %v117
  %v119 = vshll.u32 2475754826, %v113
  %v120 = vshrl.u32 2131351028, %v114
  %v121 = vor.u32 %v119, %v120
  %v122 = vshll.u32 2131351028, %v113
  %v123 = vshrl.u32 2102212464, %v114
  %v124 = vor.u32 %v122, %v123
  %v125 = vshll.u32 2102212464, %v113
  %v126 = vshrl.u32 920167782, %v114
  %v127 = vor.u32 %v125, %v126
  %v128 = vshll.u32 920167782, %v113
  %v129 = vshrl.u32 1326507024, %v114
  %v130 = vor.u32 %v128, %v129
  %vm131 = vcmp.lt.s32.totalorder %v112, 1
  %vm132 = vcmp.lt.s32.totalorder %v112, 2
  %vm133 = vcmp.lt.s32.totalorder %v112, 3
  %vm134 = vcmp.lt.s32.totalorder %v112, 4
  %v135 = vsel %vm131, %v115, %v118
  %v136 = vsel %vm134, %v124, 2102212464
  %v137 = vsel %vm133, %v121, %v136
  %v138 = vsel %vm132, %v135, %v137
  %v139 = vsel %vm131, %v118, %v121
  %v140 = vsel %vm134, %v127, 920167782
  %v141 = vsel %vm133, %v124, %v140
  %v142 = vsel %vm132, %v139, %v141
  %v143 = vsel %vm131, %v121, %v124
  %v144 = vsel %vm134, %v130, 1326507024
  %v145 = vsel %vm133, %v127, %v144
  %v146 = vsel %vm132, %v143, %v145
  %v147 = vshll.u32 %v107, 8
  %v148 = vmul.u32.u64.compose %v147, %v146
  %v149 = vextract.low.u32 %v148
  %v150 = vextract.high.u32 %v148
  %v151 = vmul.u32.u64.compose %v147, %v142
  %v152 = vextract.low.u32 %v151
  %v153 = vextract.high.u32 %v151
  %v154 = vmul.u32 %v147, %v138
  %v155 = vadd.s32 %v150, %v152
  %vm156 = vc.u32 %v150, %v152
  %v157 = vadd.s32 %v153, 1
  %v158 = vsel %vm156, %v157, %v153
  %v159 = vadd.s32 %v154, %v158
  %v160 = vadd.s32 %v159, 536870912
  %v161 = vshrl.u32 %v160, 30
  %v162 = vshll.u32 %v161, 30
  %v163 = vsub.s32 %v159, %v162
  %vm164 = vcmp.lt.s32.totalorder %v163, 0
  %v165 = vsub.s32 0, %v163
  %v166 = vsel %vm164, %v165, %v163
  %v167 = vclz %v166
  %v168 = vsub.s32 %v167, 2
  %vm169 = vcmp.gt.s32.totalorder 0, %v168
  %v170 = vsel %vm169, 0, %v168
  %v171 = vsub.s32 32, %v170
  %v172 = vshll.u32 %v163, %v170
  %v173 = vshrl.u32 %v155, %v171
  %v174 = vor.u32 %v172, %v173
  %v175 = vsub.s32 4294967266, %v170
  %v176 = vadd.s32 %v175, 127
  %v177 = vshll.u32 %v176, 23
  %v178 = vor.u32 4788187, %v177
  %v179 = vand.u32 2147483647, %v178
  %v181 = vcvt.s32.f32 %v174
  %v182 = vmul.f32 %v181, %v179
  %v183 = vxor.u32 %v182, 2147483648
  %v184 = vsel %vm101, %v183, %v182
  %v185 = vsub.s32 4, %v161
  %v186 = vsel %vm101, %v185, %v161
  %v187 = vsel %vm100, %v98, %v184
  %v188 = vsel %vm100, 0, %v186
  %v189 = vcosq.f32.pop %v187
  %v190 = vsinq.f32.pop %v187
  %vm191 = vweird.f32 %v98
  %v192 = vand.u32 %v188, 3
  %vm193 = vcmp.lt.s32.totalorder %v192, 2
  %vm194 = vcmp.eq.s32.totalorder %v192, 0
  %v195 = vxor.u32 %v190, 2147483648
  %v196 = vsel %vm194, %v189, %v195
  %vm197 = vcmp.eq.s32.totalorder %v192, 2
  %v198 = vxor.u32 %v189, 2147483648
  %v199 = vsel %vm197, %v198, %v190
  %v200 = vsel %vm193, %v196, %v199
  %v201 = vsel %vm191, nan, %v200
  %v202 = vand.u32 2147483647, %v98
  %vm203 = vcmp.le.f32.partialorder %v202, 0.7853982
  %vm204 = vcmp.lt.s32.totalorder %v98, 0
  %v205 = vand.u32 %v98, 2139095040
  %v206 = vshrl.u32 %v205, 23
  %v207 = vsub.s32 %v206, 127
  %v208 = vand.u32 2147483647, %v98
  %v209 = vand.u32 %v208, 8388607
  %v210 = vor.u32 %v209, 8388608
  %v211 = vsub.s32 0, %v210
  %v212 = vadd.s32 %v207, 1
  %vm213 = vcmp.gt.s32.totalorder %v212, 0
  %v214 = vsel %vm213, %v212, 0
  %v215 = vshrl.u32 %v214, 5
  %v216 = vand.u32 %v214, 31
  %v217 = vsub.s32 32, %v216
  %v218 = vshrl.u32 683565275, %v217
  %v219 = vshll.u32 683565275, %v216
  %v220 = vshrl.u32 2475754826, %v217
  %v221 = vor.u32 %v219, %v220
  %v222 = vshll.u32 2475754826, %v216
  %v223 = vshrl.u32 2131351028, %v217
  %v224 = vor.u32 %v222, %v223
  %v225 = vshll.u32 2131351028, %v216
  %v226 = vshrl.u32 2102212464, %v217
  %v227 = vor.u32 %v225, %v226
  %v228 = vshll.u32 2102212464, %v216
  %v229 = vshrl.u32 920167782, %v217
  %v230 = vor.u32 %v228, %v229
  %v231 = vshll.u32 920167782, %v216
  %v232 = vshrl.u32 1326507024, %v217
  %v233 = vor.u32 %v231, %v232
  %vm234 = vcmp.lt.s32.totalorder %v215, 1
  %vm235 = vcmp.lt.s32.totalorder %v215, 2
  %vm236 = vcmp.lt.s32.totalorder %v215, 3
  %vm237 = vcmp.lt.s32.totalorder %v215, 4
  %v238 = vsel %vm234, %v218, %v221
  %v239 = vsel %vm237, %v227, 2102212464
  %v240 = vsel %vm236, %v224, %v239
  %v241 = vsel %vm235, %v238, %v240
  %v242 = vsel %vm234, %v221, %v224
  %v243 = vsel %vm237, %v230, 920167782
  %v244 = vsel %vm236, %v227, %v243
  %v245 = vsel %vm235, %v242, %v244
  %v246 = vsel %vm234, %v224, %v227
  %v247 = vsel %vm237, %v233, 1326507024
  %v248 = vsel %vm236, %v230, %v247
  %v249 = vsel %vm235, %v246, %v248
  %v250 = vshll.u32 %v210, 8
  %v251 = vmul.u32.u64.compose %v250, %v249
  %v252 = vextract.low.u32 %v251
  %v253 = vextract.high.u32 %v251
  %v254 = vmul.u32.u64.compose %v250, %v245
  %v255 = vextract.low.u32 %v254
  %v256 = vextract.high.u32 %v254
  %v257 = vmul.u32 %v250, %v241
  %v258 = vadd.s32 %v253, %v255
  %vm259 = vc.u32 %v253, %v255
  %v260 = vadd.s32 %v256, 1
  %v261 = vsel %vm259, %v260, %v256
  %v262 = vadd.s32 %v257, %v261
  %v263 = vadd.s32 %v262, 536870912
  %v264 = vshrl.u32 %v263, 30
  %v265 = vshll.u32 %v264, 30
  %v266 = vsub.s32 %v262, %v265
  %vm267 = vcmp.lt.s32.totalorder %v266, 0
  %v268 = vsub.s32 0, %v266
  %v269 = vsel %vm267, %v268, %v266
  %v270 = vclz %v269
  %v271 = vsub.s32 %v270, 2
  %vm272 = vcmp.gt.s32.totalorder 0, %v271
  %v273 = vsel %vm272, 0, %v271
  %v274 = vsub.s32 32, %v273
  %v275 = vshll.u32 %v266, %v273
  %v276 = vshrl.u32 %v258, %v274
  %v277 = vor.u32 %v275, %v276
  %v278 = vsub.s32 4294967266, %v273
  %v279 = vadd.s32 %v278, 127
  %v280 = vshll.u32 %v279, 23
  %v281 = vor.u32 4788187, %v280
  %v282 = vand.u32 2147483647, %v281
  %v284 = vcvt.s32.f32 %v277
  %v285 = vmul.f32 %v284, %v282
  %v286 = vxor.u32 %v285, 2147483648
  %v287 = vsel %vm204, %v286, %v285
  %v288 = vsub.s32 4, %v264
  %v289 = vsel %vm204, %v288, %v264
  %v290 = vsel %vm203, %v98, %v287
  %v291 = vsel %vm203, 0, %v289
  %v292 = vcosq.f32.pop %v290
  %v293 = vsinq.f32.pop %v290
  %vm294 = vweird.f32 %v98
  %v295 = vadd.s32 %v291, 3
  %v296 = vand.u32 %v295, 3
  %vm297 = vcmp.lt.s32.totalorder %v296, 2
  %vm298 = vcmp.eq.s32.totalorder %v296, 0
  %v299 = vxor.u32 %v293, 2147483648
  %v300 = vsel %vm298, %v292, %v299
  %vm301 = vcmp.eq.s32.totalorder %v296, 2
  %v302 = vxor.u32 %v292, 2147483648
  %v303 = vsel %vm301, %v302, %v293
  %v304 = vsel %vm297, %v300, %v303
  %v305 = vsel %vm294, nan, %v304
  %v306 = vmul.f32 %v35, %v35
  %v307 = vmul.f32 %v65, %v65
  %v308 = vadd.f32 %v306, %v307
  %v309 = vmul.f32 %v95, %v95
  %v310 = vadd.f32 %v308, %v309
  %v311 = vrsqrt.pop %v310
  %v312 = vmul.f32 %v35, %v311
  %v313 = vmul.f32 %v65, %v311
  %v314 = vmul.f32 %v95, %v311
  %v315 = vsub.f32 0.0, %v314
  %v316 = vmul.f32 %v315, %v305
  %v317 = vmul.f32 %v314, %v201
  %v318 = vmul.f32 %v312, %v305
  %v319 = vmul.f32 %v313, %v201
  %v320 = vsub.f32 %v318, %v319
  %v321 = vmul.f32 %v316, %v316
  %v322 = vmul.f32 %v317, %v317
  %v323 = vadd.f32 %v321, %v322
  %v324 = vmul.f32 %v320, %v320
  %v325 = vadd.f32 %v323, %v324
  %v326 = vrsqrt.pop %v325
  %v327 = vmul.f32 %v316, %v326
  %v328 = vmul.f32 %v317, %v326
  %v329 = vmul.f32 %v320, %v326
  %v330 = vmul.f32 %v328, %v314
  %v331 = vmul.f32 %v329, %v313
  %v332 = vsub.f32 %v330, %v331
  %v333 = vmul.f32 %v329, %v312
  %v334 = vmul.f32 %v327, %v314
  %v335 = vsub.f32 %v333, %v334
  %v336 = vmul.f32 %v327, %v313
  %v337 = vmul.f32 %v328, %v312
  %v338 = vsub.f32 %v336, %v337
  %s339 = sadd.s32 0, 24
  %s340 = scalar_lea.vmem %s0, %s339
  %v341 = vld [vmem:[%s340] sm:$0xff]
  %s342 = scalar_lea.vmem %s0, %s27
  %v343 = vld [vmem:[%s342] sm:$0xff]
  %s344 = scalar_lea.vmem %s0, %s57
  %v345 = vld [vmem:[%s344] sm:$0xff]
  %s346 = scalar_lea.vmem %s0, %s87
  %v347 = vld [vmem:[%s346] sm:$0xff]
  %v348 = vmul.f32 %v345, %v345
  %v349 = vmul.f32 %v347, %v347
  %v350 = vadd.f32 %v348, %v349
  %v351 = vmul.f32 %v350, 2.0
  %v352 = vsub.f32 1.0, %v351
  %v353 = vmul.f32 %v343, %v345
  %v354 = vmul.f32 %v341, %v347
  %v355 = vadd.f32 %v353, %v354
  %v356 = vmul.f32 %v355, 2.0
  %v357 = vmul.f32 %v343, %v347
  %v358 = vmul.f32 %v341, %v345
  %v359 = vsub.f32 %v357, %v358
  %v360 = vmul.f32 %v359, 2.0
  %v361 = vsub.f32 %v353, %v354
  %v362 = vmul.f32 %v361, 2.0
  %v363 = vmul.f32 %v343, %v343
  %v364 = vadd.f32 %v363, %v349
  %v365 = vmul.f32 %v364, 2.0
  %v366 = vsub.f32 1.0, %v365
  %v367 = vmul.f32 %v345, %v347
  %v368 = vmul.f32 %v341, %v343
  %v369 = vadd.f32 %v367, %v368
  %v370 = vmul.f32 %v369, 2.0
  %v371 = vadd.f32 %v357, %v358
  %v372 = vmul.f32 %v371, 2.0
  %v373 = vsub.f32 %v367, %v368
  %v374 = vmul.f32 %v373, 2.0
  %v375 = vadd.f32 %v363, %v348
  %v376 = vmul.f32 %v375, 2.0
  %v377 = vsub.f32 1.0, %v376
  %v378 = vmul.f32 %v35, %v372
  %v379 = vmul.f32 %v65, %v374
  %v380 = vadd.f32 %v378, %v379
  %v381 = vmul.f32 %v95, %v377
  %v382 = vadd.f32 %v380, %v381
  %v383 = vmul.f32 %v382, 7.9113926e+08
  %v384 = vrsqrt.pop %v383
  %v385 = vmul.f32 %v383, %v384
  %vm386 = vcmp.eq.f32.partialorder %v383, inf
  %v387 = vsel %vm386, %v383, %v385
  %vm388 = vcmp.eq.f32.partialorder %v383, 0.0
  %v389 = vand.u32 %v383, 2147483648
  %v390 = vsel %vm388, %v389, %v387
  %v391 = vsub.f32 %v390, 4070.3
  %v392 = vmul.f32 %v391, 3.7243948
  %v393 = vmul.f32 %v312, %v362
  %v394 = vmul.f32 %v313, %v366
  %v395 = vadd.f32 %v393, %v394
  %v396 = vmul.f32 %v314, %v370
  %v397 = vadd.f32 %v395, %v396
  %v398 = vmul.f32 %v372, %v327
  %v399 = vmul.f32 %v374, %v328
  %v400 = vadd.f32 %v398, %v399
  %v401 = vmul.f32 %v377, %v329
  %v402 = vadd.f32 %v400, %v401
  %v403 = vsub.f32 %v397, %v402
  %v404 = vmul.f32 %v332, %v372
  %v405 = vmul.f32 %v335, %v374
  %v406 = vadd.f32 %v404, %v405
  %v407 = vmul.f32 %v338, %v377
  %v408 = vadd.f32 %v406, %v407
  %v409 = vmul.f32 %v352, %v312
  %v410 = vmul.f32 %v356, %v313
  %v411 = vadd.f32 %v409, %v410
  %v412 = vmul.f32 %v360, %v314
  %v413 = vadd.f32 %v411, %v412
  %v414 = vsub.f32 %v408, %v413
  %v415 = vmul.f32 %v327, %v352
  %v416 = vmul.f32 %v328, %v356
  %v417 = vadd.f32 %v415, %v416
  %v418 = vmul.f32 %v329, %v360
  %v419 = vadd.f32 %v417, %v418
  %v420 = vmul.f32 %v362, %v332
  %v421 = vmul.f32 %v366, %v335
  %v422 = vadd.f32 %v420, %v421
  %v423 = vmul.f32 %v370, %v338
  %v424 = vadd.f32 %v422, %v423
  %v425 = vsub.f32 %v419, %v424
  %s426 = sadd.s32 0, 80
  %s427 = scalar_lea.vmem %s0, %s426
  %v428 = vld [vmem:[%s427] sm:$0xff]
  %s429 = sadd.s32 0, 208
  %s430 = scalar_lea.vmem %s0, %s429
  %v431 = vld [vmem:[%s430] sm:$0xff]
  %v432 = vsub.f32 %v428, %v431
  %v433 = vsub.f32 0.0, %v432
  %v434 = vmul.f32 %v433, 100.0
  %s435 = sadd.s32 0, 184
  %s436 = scalar_lea.vmem %s0, %s435
  %v437 = vld [vmem:[%s436] sm:$0xff]
  %v438 = vmul.f32 %v403, 0.01
  %v439 = vsub.f32 %v437, %v438
  %v440 = vmul.f32 %v403, -70000.0
  %v441 = vmul.f32 %v434, 20000.0
  %v442 = vadd.f32 %v440, %v441
  %v443 = vmul.f32 %v439, 0.0
  %v444 = vadd.f32 %v442, %v443
  %s445 = sadd.s32 0, 88
  %s446 = scalar_lea.vmem %s0, %s445
  %v447 = vld [vmem:[%s446] sm:$0xff]
  %s448 = sadd.s32 0, 216
  %s449 = scalar_lea.vmem %s0, %s448
  %v450 = vld [vmem:[%s449] sm:$0xff]
  %v451 = vsub.f32 %v447, %v450
  %v452 = vsub.f32 0.0, %v451
  %v453 = vmul.f32 %v452, 100.0
  %s454 = sadd.s32 0, 192
  %s455 = scalar_lea.vmem %s0, %s454
  %v456 = vld [vmem:[%s455] sm:$0xff]
  %v457 = vmul.f32 %v414, 0.01
  %v458 = vsub.f32 %v456, %v457
  %v459 = vmul.f32 %v414, -70000.0
  %v460 = vmul.f32 %v453, 20000.0
  %v461 = vadd.f32 %v459, %v460
  %v462 = vmul.f32 %v458, 0.0
  %v463 = vadd.f32 %v461, %v462
  %s464 = sadd.s32 0, 96
  %s465 = scalar_lea.vmem %s0, %s464
  %v466 = vld [vmem:[%s465] sm:$0xff]
  %s467 = sadd.s32 0, 224
  %s468 = scalar_lea.vmem %s0, %s467
  %v469 = vld [vmem:[%s468] sm:$0xff]
  %v470 = vsub.f32 %v466, %v469
  %v471 = vsub.f32 0.0, %v470
  %v472 = vmul.f32 %v471, 100.0
  %s473 = sadd.s32 0, 200
  %s474 = scalar_lea.vmem %s0, %s473
  %v475 = vld [vmem:[%s474] sm:$0xff]
  %v476 = vmul.f32 %v425, 0.01
  %v477 = vsub.f32 %v475, %v476
  %v478 = vmul.f32 %v425, -60000.0
  %v479 = vmul.f32 %v472, 12000.0
  %v480 = vadd.f32 %v478, %v479
  %v481 = vmul.f32 %v477, 500.0
  %v482 = vadd.f32 %v480, %v481
  %v483 = vmul.f32 %v444, -0.5
  %v484 = vmul.f32 %v463, -0.5
  %v485 = vadd.f32 %v483, %v484
  %v486 = vadd.f32 %v485, %v482
  %v487 = vadd.f32 %v392, %v486
  %v488 = vmax.f32 %v487, 0.0
  %v489 = vmin.f32 %v488, 65535.0
  %v490 = vmul.f32 %v489, 0.2685
  %v491 = vadd.f32 %v490, 4070.3
  %v492 = vmul.f32 %v491, 4.605324e-05
  %v493 = vmul.f32 %v492, %v492
  %v494 = vmul.f32 %v493, 2.0
  %v495 = vsub.f32 %v494, 1.0
  %496 = vst [vmem:[%s1] sm:$0xff] %v495
  %v497 = vmul.f32 %v463, 0.5
  %v498 = vadd.f32 %v483, %v497
  %v499 = vmul.f32 %v482, -1.0
  %v500 = vadd.f32 %v498, %v499
  %v501 = vadd.f32 %v392, %v500
  %v502 = vmax.f32 %v501, 0.0
  %v503 = vmin.f32 %v502, 65535.0
  %v504 = vmul.f32 %v503, 0.2685
  %v505 = vadd.f32 %v504, 4070.3
  %v506 = vmul.f32 %v505, 4.605324e-05
  %v507 = vmul.f32 %v506, %v506
  %v508 = vmul.f32 %v507, 2.0
  %v509 = vsub.f32 %v508, 1.0
  %s510 = scalar_lea.vmem %s1, %s39
  %511 = vst [vmem:[%s510] sm:$0xff] %v509
  %v512 = vmul.f32 %v444, 0.5
  %v513 = vadd.f32 %v512, %v497
  %v514 = vadd.f32 %v513, %v482
  %v515 = vadd.f32 %v392, %v514
  %v516 = vmax.f32 %v515, 0.0
  %v517 = vmin.f32 %v516, 65535.0
  %v518 = vmul.f32 %v517, 0.2685
  %v519 = vadd.f32 %v518, 4070.3
  %v520 = vmul.f32 %v519, 4.605324e-05
  %v521 = vmul.f32 %v520, %v520
  %v522 = vmul.f32 %v521, 2.0
  %v523 = vsub.f32 %v522, 1.0
  %s524 = scalar_lea.vmem %s1, %s69
  %525 = vst [vmem:[%s524] sm:$0xff] %v523
  %v526 = vadd.f32 %v512, %v484
  %v527 = vadd.f32 %v526, %v499
  %v528 = vadd.f32 %v392, %v527
  %v529 = vmax.f32 %v528, 0.0
  %v530 = vmin.f32 %v529, 65535.0
  %v531 = vmul.f32 %v530, 0.2685
  %v532 = vadd.f32 %v531, 4070.3
  %v533 = vmul.f32 %v532, 4.605324e-05
  %v534 = vmul.f32 %v533, %v533
  %v535 = vmul.f32 %v534, 2.0
  %v536 = vsub.f32 %v535, 1.0
  %s537 = scalar_lea.vmem %s1, %s339
  %538 = vst [vmem:[%s537] sm:$0xff] %v536
  // Predicated region
  $region6: #{_forward.1} parent=0 // pred_check
    _
  $region7: #{_forward.1} parent=0 // pred_check_branch
    %540 = sbr.rel (0) target = $region9
  $region8: #{_forward.1} parent=0 // pred_region
    _
  $region9: #{_forward.1} parent=0 // pred_fallthru
    _
  // Predicated region
  $region10: #{_forward.1} parent=0 // pred_check
    _
  $region11: #{_forward.1} parent=0 // pred_check_branch
    %542 = sbr.rel (0) target = $region13
  $region12: #{_forward.1} parent=0 // pred_region
    _
  $region13: #{_forward.1} parent=0 // pred_fallthru
    _

</llo_original>
